<compile_context>
chip_gen: v5e
topology: v5e:2x2
jax: 0.10.0
libtpu: 0.0.40
codegen_flags: <defaults>
</compile_context>

<pallas_src>
import numpy as np
import jax
import jax.numpy as jnp
from jax.experimental import pallas as pl
from jax.experimental.pallas import tpu as pltpu

# ---------------- architecture config (static; mirrors DCNNs.__init__) ----------
LATENT = (8, 3, 3)     # cnn.deep_net[1].o_dim  -> DCNNs.i_dim
MID    = (4, 7, 7)     # cnn.deep_net[0].o_dim  -> LayerNorm shape
OUT    = (1, 15, 15)   # DCNNs.o_dim
K, S   = 3, 2          # cnn.kernels[i], cnn.stride
EPS    = 1e-5          # nn.LayerNorm default eps (elementwise_affine=False)

K1 = int(np.prod(LATENT))   # 72   (input features to GEMM 1)
N1 = int(np.prod(MID))      # 196  (LayerNorm size / input features to GEMM 2)
N2 = int(np.prod(OUT))      # 225  (real output features)

# lane-aligned (multiple-of-128) padded GEMM shapes
K1_PAD, N1_PAD, N2_PAD = 128, 256, 256
ONES_COL = K1               # x column 72 is constant 1 -> bias row of W1
INV_N1 = 1.0 / float(N1)    # fixed LayerNorm divisor over the 196 real columns


# ---------------- setup-time weight lowering (glue, plain numpy) ----------------
def _dw_scatter_matrix(w_dw, h_in, w_in, k, s):
    """Depthwise ConvTranspose2d (groups=C, padding=0) as per-channel GEMM:
       M[c, i*Win+j, (i*s+kh)*Wout + (j*s+kw)] += w_dw[c, 0, kh, kw]"""
    c = w_dw.shape[0]
    h_out = (h_in - 1) * s + k
    w_out = (w_in - 1) * s + k
    m = np.zeros((c, h_in * w_in, h_out * w_out), np.float32)
    for i in range(h_in):
        for j in range(w_in):
            for kh in range(k):
                for kw in range(k):
                    m[:, i * w_in + j, (i * s + kh) * w_out + (j * s + kw)] += w_dw[:, 0, kh, kw]
    return m


def build_layer_gemm(w_dw, b_dw, w_pw, b_pw, in_dim, k, s):
    """Compose depthwise-transposed conv + 1x1 conv into one (Cin*H*W, Cout*Ho*Wo)
       GEMM matrix plus a flat bias vector (numpy, f32)."""
    c_in, h_in, w_in = in_dim
    c_out = w_pw.shape[1]
    h_out = (h_in - 1) * s + k
    w_out = (w_in - 1) * s + k
    m = _dw_scatter_matrix(np.asarray(w_dw, np.float32), h_in, w_in, k, s)   # (C, HW, HoWo)
    wp = np.asarray(w_pw, np.float32)[:, :, 0, 0]                            # (Cin, Cout)
    big = np.einsum('cpq,cd->cpdq', m, wp).reshape(
        c_in * h_in * w_in, c_out * h_out * w_out).astype(np.float32)
    bias = (np.asarray(b_dw, np.float32) @ wp + np.asarray(b_pw, np.float32))  # (Cout,)
    bias = np.repeat(bias, h_out * w_out).astype(np.float32)                   # (Cout*Ho*Wo,)
    return big, bias


def build_padded_params(params):
    """Lane-aligned, bf16 GEMM operands. W1 carries its bias in row ONES_COL."""
    wd1, bd1, wp1, bp1, wd2, bd2, wp2, bp2 = params
    W1, b1 = build_layer_gemm(wd1, bd1, wp1, bp1, LATENT, K, S)   # (72, 196), (196,)
    W2, b2 = build_layer_gemm(wd2, bd2, wp2, bp2, MID, K, S)      # (196, 225), (225,)

    W1p = np.zeros((K1_PAD, N1_PAD), np.float32)
    W1p[:K1, :N1] = W1
    W1p[ONES_COL, :N1] = b1            # bias fold: x[:, 72] == 1
    W2p = np.zeros((N1_PAD, N2_PAD), np.float32)
    W2p[:N1, :N2] = W2                 # padded rows (196..255) stay zero
    b2p = np.zeros((1, N2_PAD), np.float32)
    b2p[0, :N2] = b2
    return (jnp.asarray(W1p, jnp.bfloat16),
            jnp.asarray(W2p, jnp.bfloat16),
            jnp.asarray(b2p, jnp.float32))


# ---------------- the Pallas kernel (hot path) ----------------
def dcnns_kernel(x_ref, w1_ref, w2_ref, b2_ref, o_ref):
    # GEMM 1 (depthwise-T + pointwise + bias, bias folded via ones column of x);
    # bf16 operands, f32 accumulation on the MXU.
    h = jnp.dot(x_ref[...], w1_ref[...], preferred_element_type=jnp.float32)

    # LayerNorm over the 196 real columns (no affine).  Padded columns 196..255
    # are exactly zero pre-LN (zero W1 cols, zero folded bias), so full-width
    # sums equal the real sums; use the fixed 1/196 divisor.  One pass: sum and
    # sum-of-squares, var = E[x^2] - mu^2.
    s1 = jnp.sum(h, axis=-1, keepdims=True)
    s2 = jnp.sum(h * h, axis=-1, keepdims=True)
    mu = s1 * INV_N1
    var = s2 * INV_N1 - mu * mu
    h = (h - mu) * jax.lax.rsqrt(var + EPS)

    # cnn.fnc_activation: ReLU (kept in f32 — v5e has no bf16 VPU path)
    h = jnp.maximum(h, 0.0)

    # GEMM 2 + bias + sigmoid.  Post-LN padded columns of h are non-zero, but
    # the corresponding rows of W2 are zero, so they never reach real outputs.
    z = jnp.dot(h.astype(jnp.bfloat16), w2_ref[...],
                preferred_element_type=jnp.float32) + b2_ref[...]
    o_ref[...] = jax.nn.sigmoid(z)


def dcnns_forward(x2d, w1p, w2p, b2p):
    """x2d: (B, 72) flattened latent (as in DCNNs.forward x.view(-1, *i_dim))."""
    bn = x2d.shape[0]
    # batch tiling: 128-row tiles when large (fills MXU rows, shards across
    # v7x's two TensorCores); otherwise one tile padded to a multiple of 16
    # (full bf16 sublane packing).
    b_tile = 128 if bn >= 128 else ((bn + 15) // 16) * 16
    bp = ((bn + b_tile - 1) // b_tile) * b_tile

    xp = jnp.zeros((bp, K1_PAD), jnp.bfloat16)
    xp = xp.at[:bn, :K1].set(x2d.astype(jnp.bfloat16))
    xp = xp.at[:, ONES_COL].set(1.0)          # constant-1 column -> bias1 fold

    grid_spec = pltpu.PrefetchScalarGridSpec(
        num_scalar_prefetch=0,
        grid=(bp // b_tile,),
        in_specs=[
            pl.BlockSpec((b_tile, K1_PAD), lambda i: (i, 0)),
            pl.BlockSpec((K1_PAD, N1_PAD), lambda i: (0, 0)),   # weights stay resident
            pl.BlockSpec((N1_PAD, N2_PAD), lambda i: (0, 0)),
            pl.BlockSpec((1, N2_PAD), lambda i: (0, 0)),
        ],
        out_specs=pl.BlockSpec((b_tile, N2_PAD), lambda i: (i, 0)),
    )
    out = pl.pallas_call(
        dcnns_kernel,
        out_shape=jax.ShapeDtypeStruct((bp, N2_PAD), jnp.float32),
        grid_spec=grid_spec,
        compiler_params=pltpu.CompilerParams(
            dimension_semantics=("parallel",)),   # megacore sharding on v7x
    )(xp, w1p, w2p, b2p)
    # slice off batch padding and the padded output columns, back to NCHW
    return out[:bn, :N2].reshape(bn, *OUT)


# ---------------- independent numpy reference (PyTorch semantics, f32) ----------
def _convT_dw(x, w, b, s):          # x (B,C,H,W), w (C,1,k,k), b (C,)
    Bn, C, H, W = x.shape
    k = w.shape[2]
    Ho, Wo = (H - 1) * s + k, (W - 1) * s + k
    out = np.zeros((Bn, C, Ho, Wo), np.float32)
    for i in range(H):
        for j in range(W):
            for kh in range(k):
                for kw in range(k):
                    out[:, :, i * s + kh, j * s + kw] += x[:, :, i, j] * w[:, 0, kh, kw]
    return out + b[None, :, None, None]


def _convT_pw(x, w, b):             # w (Cin,Cout,1,1), b (Cout,)
    return np.einsum('bchw,cd->bdhw', x, w[:, :, 0, 0]) + b[None, :, None, None]


def ref_forward(x2d, params):
    wd1, bd1, wp1, bp1, wd2, bd2, wp2, bp2 = [np.asarray(p, np.float32) for p in params]
    h = np.asarray(x2d, np.float32).reshape(-1, *LATENT)
    h = _convT_pw(_convT_dw(h, wd1, bd1, S), wp1, bp1)
    mu = h.mean(axis=(1, 2, 3), keepdims=True)
    var = h.var(axis=(1, 2, 3), keepdims=True)
    h = (h - mu) / np.sqrt(var + EPS)
    h = np.maximum(h, 0.0)
    h = _convT_pw(_convT_dw(h, wd2, bd2, S), wp2, bp2)
    return 1.0 / (1.0 + np.exp(-h))


# TODO(synk): check_OutputSize / np.prod shape validation + sys.exit in __init__ is
# init-time plumbing only; it is folded into the static config above.

if __name__ == "__main__":
    key = jax.random.PRNGKey(0)
    ks = jax.random.split(key, 10)
    sc = 0.3
    # deep_net[0] = Xception((8,3,3) -> 4 channels, k=3, s=2, transpose=True)
    wd1 = sc * jax.random.normal(ks[0], (LATENT[0], 1, K, K), jnp.float32)       # depthwise ConvT
    bd1 = sc * jax.random.normal(ks[1], (LATENT[0],), jnp.float32)
    wp1 = sc * jax.random.normal(ks[2], (LATENT[0], MID[0], 1, 1), jnp.float32)  # pointwise ConvT
    bp1 = sc * jax.random.normal(ks[3], (MID[0],), jnp.float32)
    # recon = Xception((4,7,7) -> 1 channel, k=3, s=2, transpose=True)
    wd2 = sc * jax.random.normal(ks[4], (MID[0], 1, K, K), jnp.float32)
    bd2 = sc * jax.random.normal(ks[5], (MID[0],), jnp.float32)
    wp2 = sc * jax.random.normal(ks[6], (MID[0], OUT[0], 1, 1), jnp.float32)
    bp2 = sc * jax.random.normal(ks[7], (OUT[0],), jnp.float32)
    params = (wd1, bd1, wp1, bp1, wd2, bd2, wp2, bp2)

    W1p, W2p, B2p = build_padded_params(params)   # (128,256) bf16, (256,256) bf16, (1,256) f32

    # module-spec small batch + a larger batch that exercises the multi-tile
    # parallel batch grid (two 128-row tiles with padded tail rows)
    x_small = jax.random.normal(ks[8], (2, K1), jnp.float32)
    x_big   = jax.random.normal(ks[9], (130, K1), jnp.float32)

    for x in (x_small, x_big):
        y = jax.block_until_ready(dcnns_forward(x, W1p, W2p, B2p))   # (B, 1, 15, 15)
        y_ref = ref_forward(x, params)
        # tolerance accounts for bf16 MXU inputs (f32 accumulation)
        np.testing.assert_allclose(np.asarray(y), y_ref, rtol=2e-2, atol=2e-2)

    print("KERNEL_OK")
</pallas_src>

<mosaic_0001>
module attributes {stable_mosaic.version = 11 : i64} {
  func.func @dcnns_kernel(%arg0: i32, %arg1: memref<16x128xbf16, #tpu.memory_space<vmem>>, %arg2: memref<128x256xbf16, #tpu.memory_space<vmem>>, %arg3: memref<256x256xbf16, #tpu.memory_space<vmem>>, %arg4: memref<1x256xf32, #tpu.memory_space<vmem>>, %arg5: memref<16x256xf32, #tpu.memory_space<vmem>>) attributes {dimension_semantics = [#tpu.dimension_semantics<parallel>], iteration_bounds = array<i64: 1>, scalar_prefetch = 0 : i64, scratch_operands = 0 : i64, tpu.core_type = #tpu.core_type<tc>, window_params = [{transform_indices = @transform_0, window_bounds = array<i64: 16, 128>}, {pipeline_mode = #tpu.pipeline_mode<synchronous>, transform_indices = @transform_1, window_bounds = array<i64: 128, 256>}, {pipeline_mode = #tpu.pipeline_mode<synchronous>, transform_indices = @transform_2, window_bounds = array<i64: 256, 256>}, {pipeline_mode = #tpu.pipeline_mode<synchronous>, transform_indices = @transform_3, window_bounds = array<i64: 1, 256>}, {transform_indices = @transform_4, window_bounds = array<i64: 16, 256>}]} {
    %c0 = arith.constant 0 : index
    %c0_0 = arith.constant 0 : index
    %0 = vector.load %arg1[%c0, %c0_0] : memref<16x128xbf16, #tpu.memory_space<vmem>>, vector<16x128xbf16>
    %c0_1 = arith.constant 0 : index
    %c0_2 = arith.constant 0 : index
    %1 = vector.load %arg2[%c0_1, %c0_2] : memref<128x256xbf16, #tpu.memory_space<vmem>>, vector<128x256xbf16>
    %cst = arith.constant dense<0.000000e+00> : vector<16x256xf32>
    %2 = tpu.matmul %0, %1, %cst {dimension_numbers = #tpu.dot_dimension_numbers<[1], [0], [0], [1], [0, 0, 1, 1], [], []>} : vector<16x128xbf16>, vector<128x256xbf16>, vector<16x256xf32> -> vector<16x256xf32>
    %cst_3 = arith.constant dense<0.000000e+00> : vector<16xf32>
    %3 = vector.multi_reduction <add>, %2, %cst_3 [1] : vector<16x256xf32> to vector<16xf32>
    %4 = vector.shape_cast %3 : vector<16xf32> to vector<16x1xf32>
    %5 = arith.mulf %2, %2 : vector<16x256xf32>
    %cst_4 = arith.constant dense<0.000000e+00> : vector<16xf32>
    %6 = vector.multi_reduction <add>, %5, %cst_4 [1] : vector<16x256xf32> to vector<16xf32>
    %7 = vector.shape_cast %6 : vector<16xf32> to vector<16x1xf32>
    %cst_5 = arith.constant 0.00510204071 : f32
    %8 = vector.broadcast %cst_5 : f32 to vector<16x1xf32>
    %9 = arith.mulf %4, %8 : vector<16x1xf32>
    %cst_6 = arith.constant 0.00510204071 : f32
    %10 = vector.broadcast %cst_6 : f32 to vector<16x1xf32>
    %11 = arith.mulf %7, %10 : vector<16x1xf32>
    %12 = arith.mulf %9, %9 : vector<16x1xf32>
    %13 = arith.subf %11, %12 : vector<16x1xf32>
    %14 = vector.broadcast %9 : vector<16x1xf32> to vector<16x256xf32>
    %15 = arith.subf %2, %14 : vector<16x256xf32>
    %cst_7 = arith.constant 9.99999974E-6 : f32
    %16 = vector.broadcast %cst_7 : f32 to vector<16x1xf32>
    %17 = arith.addf %13, %16 : vector<16x1xf32>
    %18 = math.rsqrt %17 : vector<16x1xf32>
    %19 = vector.broadcast %18 : vector<16x1xf32> to vector<16x256xf32>
    %20 = arith.mulf %15, %19 : vector<16x256xf32>
    %cst_8 = arith.constant 0.000000e+00 : f32
    %21 = vector.broadcast %cst_8 : f32 to vector<16x256xf32>
    %22 = arith.maximumf %20, %21 : vector<16x256xf32>
    %23 = arith.truncf %22 : vector<16x256xf32> to vector<16x256xbf16>
    %c0_9 = arith.constant 0 : index
    %c0_10 = arith.constant 0 : index
    %24 = vector.load %arg3[%c0_9, %c0_10] : memref<256x256xbf16, #tpu.memory_space<vmem>>, vector<256x256xbf16>
    %cst_11 = arith.constant dense<0.000000e+00> : vector<16x256xf32>
    %25 = tpu.matmul %23, %24, %cst_11 {dimension_numbers = #tpu.dot_dimension_numbers<[1], [0], [0], [1], [0, 0, 1, 1], [], []>} : vector<16x256xbf16>, vector<256x256xbf16>, vector<16x256xf32> -> vector<16x256xf32>
    %c0_12 = arith.constant 0 : index
    %c0_13 = arith.constant 0 : index
    %26 = vector.load %arg4[%c0_12, %c0_13] : memref<1x256xf32, #tpu.memory_space<vmem>>, vector<1x256xf32>
    %27 = vector.broadcast %26 : vector<1x256xf32> to vector<16x256xf32>
    %28 = arith.addf %25, %27 : vector<16x256xf32>
    %29 = arith.negf %28 : vector<16x256xf32>
    %30 = math.exp %29 : vector<16x256xf32>
    %cst_14 = arith.constant 1.000000e+00 : f32
    %31 = vector.broadcast %cst_14 : f32 to vector<16x256xf32>
    %32 = arith.addf %31, %30 : vector<16x256xf32>
    %33 = arith.divf %31, %32 : vector<16x256xf32>
    %c0_15 = arith.constant 0 : index
    %c0_16 = arith.constant 0 : index
    %34 = vector.load %arg5[%c0_15, %c0_16] : memref<16x256xf32, #tpu.memory_space<vmem>>, vector<16x256xf32>
    tpu.vector_store %arg5[%c0_15, %c0_16], %33 {strides = array<i32>} : memref<16x256xf32, #tpu.memory_space<vmem>>, vector<16x256xf32>,
    return
  }
  func.func @transform_0(%arg0: i32) -> (i32, i32) {
    %c0_i32 = arith.constant 0 : i32
    %c0_i32_0 = arith.constant 0 : i32
    return %arg0, %c0_i32 : i32, i32
  }
  func.func @transform_1(%arg0: i32) -> (i32, i32) {
    %c0_i32 = arith.constant 0 : i32
    %c0_i32_0 = arith.constant 0 : i32
    %c0_i32_1 = arith.constant 0 : i32
    return %c0_i32, %c0_i32_0 : i32, i32
  }
  func.func @transform_2(%arg0: i32) -> (i32, i32) {
    %c0_i32 = arith.constant 0 : i32
    %c0_i32_0 = arith.constant 0 : i32
    %c0_i32_1 = arith.constant 0 : i32
    return %c0_i32, %c0_i32_0 : i32, i32
  }
  func.func @transform_3(%arg0: i32) -> (i32, i32) {
    %c0_i32 = arith.constant 0 : i32
    %c0_i32_0 = arith.constant 0 : i32
    %c0_i32_1 = arith.constant 0 : i32
    return %c0_i32, %c0_i32_0 : i32, i32
  }
  func.func @transform_4(%arg0: i32) -> (i32, i32) {
    %c0_i32 = arith.constant 0 : i32
    %c0_i32_0 = arith.constant 0 : i32
    return %arg0, %c0_i32 : i32, i32
  }
}

</mosaic_0001>

<llo_original>
// kernel: tpu_custom_call.1
$region0: #{tpu_custom_call.1}
  #allocation0 [shape = 'u32[]', space=smem, size = 0x4, offset = 0x4, fixed_abs, tag = 'smem constant byte address 0x4 - core index']
  #allocation1 [shape = 'u32[72,128]{1,0:T(1,128)}', space=vmem, size = 0x9000, scoped, tag = 'internal scratch']
  %s0 = inlined_call_operand.hbm [shape: bf16[16,128], index: 0, kind: input, shape index: {}]
  %s1 = inlined_call_operand.hbm [shape: bf16[128,256], index: 1, kind: input, shape index: {}]
  %s2 = inlined_call_operand.hbm [shape: bf16[256,256], index: 2, kind: input, shape index: {}]
  %s3 = inlined_call_operand.vmem [shape: f32[1,256], index: 3, kind: input, shape index: {}]
  %s4 = inlined_call_operand.hbm [shape: f32[16,256], index: 4, kind: output, shape index: {}]
  %s5 = sld [smem:[#allocation0]]
  $region38: #{tpu_custom_call.1} parent=0
    _
  %s7 = ssub.s32 1, %s5
  %s8 = scalar_select 0, %s7, %s5
  $region1: #{tpu_custom_call.1} parent=0
    #allocation2 [shape = 'u8[4096]{0}', space=vmem, size = 0x1000, scoped, tag = 'input window, operand 0, single buffered']
    #allocation3 [shape = 's32[1]{0}', space=sflag, size = 0x4, scoped, tag = 'scoped memory for tpu_custom_call.1']
    #allocation4 [shape = 's32[1]{0}', space=sflag, size = 0x4, scoped, tag = 'scoped memory for tpu_custom_call.1']
    #allocation5 [shape = 'u8[65536]{0}', space=vmem, size = 0x10000, scoped, tag = 'input window, operand 1, single buffered']
    #allocation6 [shape = 's32[1]{0}', space=sflag, size = 0x4, scoped, tag = 'scoped memory for tpu_custom_call.1']
    #allocation7 [shape = 'u8[131072]{0}', space=vmem, size = 0x20000, scoped, tag = 'input window, operand 2, single buffered']
    #allocation8 [shape = 'u8[16384]{0}', space=vmem, size = 0x4000, scoped, tag = 'output window, operand 0, single buffered']
    %9 = vsyncpa [#allocation3], 0
    %10 = vsyncpa [#allocation6], 0
    %11 = vsyncpa [#allocation4], 0
    // Predicated region
    $region2: #{tpu_custom_call.1} parent=1 // pred_check
      _
    $region3: #{tpu_custom_call.1} parent=1 // pred_check_branch
      %13 = sbr.rel (0) target = $region5
    $region4: #{tpu_custom_call.1} parent=1 // pred_region
      %15 = vsyncadd [#allocation3], 0
      %s16 = sshll.u32 %s0, 4
      %s17 = int_to_ptr.hbm [resolvable:$true] %s16
      %s18 = sshll.u32 [#allocation2], 4
      %s19 = int_to_ptr.vmem [resolvable:$true] %s18
      %24 = dma.hbm_to_vmem [thread:$0]  %s17, 128, %s19, [#allocation3], 64, 64, 4
    $region5: #{tpu_custom_call.1} parent=1 // pred_fallthru
      _
    // Predicated region
    $region6: #{tpu_custom_call.1} parent=1 // pred_check
      _
    $region7: #{tpu_custom_call.1} parent=1 // pred_check_branch
      %26 = sbr.rel (0) target = $region9
    $region8: #{tpu_custom_call.1} parent=1 // pred_region
      %28 = vsyncadd [#allocation6], 0
      %s29 = sshll.u32 %s1, 4
      %s30 = int_to_ptr.hbm [resolvable:$true] %s29
      %s31 = sshll.u32 [#allocation5], 4
      %s32 = int_to_ptr.vmem [resolvable:$true] %s31
      %37 = dma.hbm_to_vmem [thread:$0]  %s30, 2048, %s32, [#allocation6], 128, 128, 8
    $region9: #{tpu_custom_call.1} parent=1 // pred_fallthru
      _
    // Predicated region
    $region10: #{tpu_custom_call.1} parent=1 // pred_check
      _
    $region11: #{tpu_custom_call.1} parent=1 // pred_check_branch
      %39 = sbr.rel (0) target = $region13
    $region12: #{tpu_custom_call.1} parent=1 // pred_region
      %41 = vsyncadd [#allocation6], 0
      %s42 = sshll.u32 %s2, 4
      %s43 = int_to_ptr.hbm [resolvable:$true] %s42
      %s44 = sshll.u32 [#allocation7], 4
      %s45 = int_to_ptr.vmem [resolvable:$true] %s44
      %50 = dma.hbm_to_vmem [thread:$0]  %s43, 4096, %s45, [#allocation6], 128, 128, 8
    $region13: #{tpu_custom_call.1} parent=1 // pred_fallthru
      _
    // Predicated region
    $region14: #{tpu_custom_call.1} parent=1 // pred_check
      _
    $region15: #{tpu_custom_call.1} parent=1 // pred_check_branch
      %52 = sbr.rel (0) target = $region17
    $region16: #{tpu_custom_call.1} parent=1 // pred_region
      _
    $region17: #{tpu_custom_call.1} parent=1 // pred_fallthru
      _
    // Predicated region
    $region18: #{tpu_custom_call.1} parent=1 // pred_check
      _
    $region19: #{tpu_custom_call.1} parent=1 // pred_check_branch
      %54 = sbr.rel (0) target = $region21
    $region20: #{tpu_custom_call.1} parent=1 // pred_region
      %56 = dma.done [#allocation3], 128
    $region21: #{tpu_custom_call.1} parent=1 // pred_fallthru
      _
    // Predicated region
    $region22: #{tpu_custom_call.1} parent=1 // pred_check
      _
    $region23: #{tpu_custom_call.1} parent=1 // pred_check_branch
      %58 = sbr.rel (0) target = $region25
    $region24: #{tpu_custom_call.1} parent=1 // pred_region
      %60 = dma.done [#allocation6], 2048
    $region25: #{tpu_custom_call.1} parent=1 // pred_fallthru
      _
    // Predicated region
    $region26: #{tpu_custom_call.1} parent=1 // pred_check
      _
    $region27: #{tpu_custom_call.1} parent=1 // pred_check_branch
      %62 = sbr.rel (0) target = $region29
    $region28: #{tpu_custom_call.1} parent=1 // pred_region
      %64 = dma.done [#allocation6], 4096
    $region29: #{tpu_custom_call.1} parent=1 // pred_fallthru
      _
    %v65 = vld [vmem:[#allocation2] sm:$0xf]
    %v66 = vld [vmem:[#allocation2 + $0x4] sm:$0xf]
    %v67 = vld [vmem:[#allocation5] sm:$0xff]
    %v68 = vld [vmem:[#allocation5 + $0x8] sm:$0xff]
    %v69 = vld [vmem:[#allocation5 + $0x10] sm:$0xff]
    %v70 = vld [vmem:[#allocation5 + $0x18] sm:$0xff]
    %v71 = vld [vmem:[#allocation5 + $0x20] sm:$0xff]
    %v72 = vld [vmem:[#allocation5 + $0x28] sm:$0xff]
    %v73 = vld [vmem:[#allocation5 + $0x30] sm:$0xff]
    %v74 = vld [vmem:[#allocation5 + $0x38] sm:$0xff]
    %v75 = vld [vmem:[#allocation5 + $0x40] sm:$0xff]
    %v76 = vld [vmem:[#allocation5 + $0x48] sm:$0xff]
    %v77 = vld [vmem:[#allocation5 + $0x50] sm:$0xff]
    %v78 = vld [vmem:[#allocation5 + $0x58] sm:$0xff]
    %v79 = vld [vmem:[#allocation5 + $0x60] sm:$0xff]
    %v80 = vld [vmem:[#allocation5 + $0x68] sm:$0xff]
    %v81 = vld [vmem:[#allocation5 + $0x70] sm:$0xff]
    %v82 = vld [vmem:[#allocation5 + $0x78] sm:$0xff]
    %v85 = vunpack.c.l.b16 %v65
    %v86 = vunpack.c.l.b16 %v66
    %v87 = vpack.c.b16 %v86, %v85
    %v105 = vunpack.c.l.b16 %v67
    %v106 = vunpack.c.h.b16 %v67
    %v107 = vunpack.c.l.b16 %v68
    %v108 = vunpack.c.h.b16 %v68
    %v109 = vunpack.c.l.b16 %v69
    %v110 = vunpack.c.h.b16 %v69
    %v111 = vunpack.c.l.b16 %v70
    %v112 = vunpack.c.h.b16 %v70
    %v113 = vunpack.c.l.b16 %v71
    %v114 = vunpack.c.h.b16 %v71
    %v115 = vunpack.c.l.b16 %v72
    %v116 = vunpack.c.h.b16 %v72
    %v117 = vunpack.c.l.b16 %v73
    %v118 = vunpack.c.h.b16 %v73
    %v119 = vunpack.c.l.b16 %v74
    %v120 = vunpack.c.h.b16 %v74
    %v121 = vunpack.c.l.b16 %v75
    %v122 = vunpack.c.h.b16 %v75
    %v123 = vunpack.c.l.b16 %v76
    %v124 = vunpack.c.h.b16 %v76
    %v125 = vunpack.c.l.b16 %v77
    %v126 = vunpack.c.h.b16 %v77
    %v127 = vunpack.c.l.b16 %v78
    %v128 = vunpack.c.h.b16 %v78
    %v129 = vunpack.c.l.b16 %v79
    %v130 = vunpack.c.h.b16 %v79
    %v131 = vunpack.c.l.b16 %v80
    %v132 = vunpack.c.h.b16 %v80
    %v133 = vunpack.c.l.b16 %v81
    %v134 = vunpack.c.h.b16 %v81
    %v135 = vunpack.c.l.b16 %v82
    %v136 = vunpack.c.h.b16 %v82
    %v137 = vpack.c.b16 %v107, %v105
    %v138 = vpack.c.b16 %v108, %v106
    %v139 = vpack.c.b16 %v111, %v109
    %v140 = vpack.c.b16 %v112, %v110
    %v141 = vpack.c.b16 %v115, %v113
    %v142 = vpack.c.b16 %v116, %v114
    %v143 = vpack.c.b16 %v119, %v117
    %v144 = vpack.c.b16 %v120, %v118
    %v145 = vpack.c.b16 %v123, %v121
    %v146 = vpack.c.b16 %v124, %v122
    %v147 = vpack.c.b16 %v127, %v125
    %v148 = vpack.c.b16 %v128, %v126
    %v149 = vpack.c.b16 %v131, %v129
    %v150 = vpack.c.b16 %v132, %v130
    %v151 = vpack.c.b16 %v135, %v133
    %v152 = vpack.c.b16 %v136, %v134
    %169 = vmatpush.bf16.msra.mxu0 %v151
    %170 = vmatpush.bf16.msra.mxu0 %v149
    %171 = vmatpush.bf16.msra.mxu0 %v147
    %172 = vmatpush.bf16.msra.mxu0 %v145
    %173 = vmatpush.bf16.msra.mxu0 %v143
    %174 = vmatpush.bf16.msra.mxu0 %v141
    %175 = vmatpush.bf16.msra.mxu0 %v139
    %176 = vmatpush.bf16.msra.mxu0 %v137
    %177 = vmatmul.bf16.gmra.mxu0 %v87
    %v178 = vpop.f32.mrf.mxu0
    %v179 = vadd.f32 0.0, %v178
    %v180 = vpop.f32.mrf.mxu0
    %v181 = vadd.f32 0.0, %v180
    %182 = vdwg.mxu0
    %183 = vmatpush.bf16.msra.mxu0 %v152
    %184 = vmatpush.bf16.msra.mxu0 %v150
    %185 = vmatpush.bf16.msra.mxu0 %v148
    %186 = vmatpush.bf16.msra.mxu0 %v146
    %187 = vmatpush.bf16.msra.mxu0 %v144
    %188 = vmatpush.bf16.msra.mxu0 %v142
    %189 = vmatpush.bf16.msra.mxu0 %v140
    %190 = vmatpush.bf16.msra.mxu0 %v138
    %191 = vmatmul.bf16.gmra.mxu0 %v87
    %v192 = vpop.f32.mrf.mxu0
    %v193 = vadd.f32 0.0, %v192
    %v194 = vpop.f32.mrf.mxu0
    %v195 = vadd.f32 0.0, %v194
    %196 = vdwg.mxu0
    %v197 = vadd.f32 %v179, %v193
    %198 = vadd.xlane.f32.xlu0 %v197
    %v199 = vpop.xlane.xlu0 %198
    %v200 = vadd.f32 %v181, %v195
    %201 = vadd.xlane.f32.xlu0 %v200
    %v202 = vpop.xlane.xlu0 %201
    %v203 = vmul.f32 %v179, %v179
    %v204 = vmul.f32 %v193, %v193
    %v205 = vmul.f32 %v181, %v181
    %v206 = vmul.f32 %v195, %v195
    %v207 = vadd.f32 %v203, %v204
    %208 = vadd.xlane.f32.xlu0 %v207
    %v209 = vpop.xlane.xlu0 %208
    %v210 = vadd.f32 %v205, %v206
    %211 = vadd.xlane.f32.xlu0 %v210
    %v212 = vpop.xlane.xlu0 %211
    %v213 = vmul.f32 %v199, 0.0051020407
    %v214 = vmul.f32 %v202, 0.0051020407
    %v215 = vmul.f32 %v209, 0.0051020407
    %v216 = vmul.f32 %v212, 0.0051020407
    %v217 = vmul.f32 %v213, %v213
    %v218 = vmul.f32 %v214, %v214
    %v219 = vsub.f32 %v215, %v217
    %v220 = vsub.f32 %v216, %v218
    %v221 = vsub.f32 %v179, %v213
    %v222 = vsub.f32 %v193, %v213
    %v223 = vsub.f32 %v181, %v214
    %v224 = vsub.f32 %v195, %v214
    %v225 = vadd.f32 %v219, 1e-05
    %v226 = vadd.f32 %v220, 1e-05
    %v227 = vrsqrt.pop %v225
    %v228 = vmul.f32 %v227, %v225
    %v229 = vmul.f32 %v228, %v227
    %v230 = vmul.f32 0.5, %v229
    %v231 = vsub.f32 1.5, %v230
    %v232 = vmul.f32 %v227, %v231
    %vm233 = vweird.f32 %v225
    %vm234 = vweird.f32 %v227
    %vm235 = vmor %vm233, %vm234
    %v236 = vsel %vm235, %v227, %v232
    %v237 = vrsqrt.pop %v226
    %v238 = vmul.f32 %v237, %v226
    %v239 = vmul.f32 %v238, %v237
    %v240 = vmul.f32 0.5, %v239
    %v241 = vsub.f32 1.5, %v240
    %v242 = vmul.f32 %v237, %v241
    %vm243 = vweird.f32 %v226
    %vm244 = vweird.f32 %v237
    %vm245 = vmor %vm243, %vm244
    %v246 = vsel %vm245, %v237, %v242
    %v247 = vmul.f32 %v221, %v236
    %v248 = vmul.f32 %v222, %v236
    %v249 = vmul.f32 %v223, %v246
    %v250 = vmul.f32 %v224, %v246
    %v251 = vmax.f32 %v247, 0.0
    %v252 = vmax.f32 %v248, 0.0
    %v253 = vmax.f32 %v249, 0.0
    %v254 = vmax.f32 %v250, 0.0
    %v255 = vpack.c.bf16 %v253, %v251
    %v256 = vpack.c.bf16 %v254, %v252
    %v257 = vld [vmem:[#allocation7] sm:$0xff]
    %v258 = vld [vmem:[#allocation7 + $0x8] sm:$0xff]
    %v259 = vld [vmem:[#allocation7 + $0x10] sm:$0xff]
    %v260 = vld [vmem:[#allocation7 + $0x18] sm:$0xff]
    %v261 = vld [vmem:[#allocation7 + $0x20] sm:$0xff]
    %v262 = vld [vmem:[#allocation7 + $0x28] sm:$0xff]
    %v263 = vld [vmem:[#allocation7 + $0x30] sm:$0xff]
    %v264 = vld [vmem:[#allocation7 + $0x38] sm:$0xff]
    %v265 = vld [vmem:[#allocation7 + $0x40] sm:$0xff]
    %v266 = vld [vmem:[#allocation7 + $0x48] sm:$0xff]
    %v267 = vld [vmem:[#allocation7 + $0x50] sm:$0xff]
    %v268 = vld [vmem:[#allocation7 + $0x58] sm:$0xff]
    %v269 = vld [vmem:[#allocation7 + $0x60] sm:$0xff]
    %v270 = vld [vmem:[#allocation7 + $0x68] sm:$0xff]
    %v271 = vld [vmem:[#allocation7 + $0x70] sm:$0xff]
    %v272 = vld [vmem:[#allocation7 + $0x78] sm:$0xff]
    %v273 = vld [vmem:[#allocation7 + $0x80] sm:$0xff]
    %v274 = vld [vmem:[#allocation7 + $0x88] sm:$0xff]
    %v275 = vld [vmem:[#allocation7 + $0x90] sm:$0xff]
    %v276 = vld [vmem:[#allocation7 + $0x98] sm:$0xff]
    %v277 = vld [vmem:[#allocation7 + $0xa0] sm:$0xff]
    %v278 = vld [vmem:[#allocation7 + $0xa8] sm:$0xff]
    %v279 = vld [vmem:[#allocation7 + $0xb0] sm:$0xff]
    %v280 = vld [vmem:[#allocation7 + $0xb8] sm:$0xff]
    %v281 = vld [vmem:[#allocation7 + $0xc0] sm:$0xff]
    %v282 = vld [vmem:[#allocation7 + $0xc8] sm:$0xff]
    %v283 = vld [vmem:[#allocation7 + $0xd0] sm:$0xff]
    %v284 = vld [vmem:[#allocation7 + $0xd8] sm:$0xff]
    %v285 = vld [vmem:[#allocation7 + $0xe0] sm:$0xff]
    %v286 = vld [vmem:[#allocation7 + $0xe8] sm:$0xff]
    %v287 = vld [vmem:[#allocation7 + $0xf0] sm:$0xff]
    %v288 = vld [vmem:[#allocation7 + $0xf8] sm:$0xff]
    %v289 = vld [vmem:[%s3] sm:$0x3]
    %v291 = vperm.slane %v289, 0
    %v292 = vperm.slane %v289, 1
    %v327 = vunpack.c.l.b16 %v257
    %v328 = vunpack.c.h.b16 %v257
    %v329 = vunpack.c.l.b16 %v258
    %v330 = vunpack.c.h.b16 %v258
    %v331 = vunpack.c.l.b16 %v259
    %v332 = vunpack.c.h.b16 %v259
    %v333 = vunpack.c.l.b16 %v260
    %v334 = vunpack.c.h.b16 %v260
    %v335 = vunpack.c.l.b16 %v261
    %v336 = vunpack.c.h.b16 %v261
    %v337 = vunpack.c.l.b16 %v262
    %v338 = vunpack.c.h.b16 %v262
    %v339 = vunpack.c.l.b16 %v263
    %v340 = vunpack.c.h.b16 %v263
    %v341 = vunpack.c.l.b16 %v264
    %v342 = vunpack.c.h.b16 %v264
    %v343 = vunpack.c.l.b16 %v265
    %v344 = vunpack.c.h.b16 %v265
    %v345 = vunpack.c.l.b16 %v266
    %v346 = vunpack.c.h.b16 %v266
    %v347 = vunpack.c.l.b16 %v267
    %v348 = vunpack.c.h.b16 %v267
    %v349 = vunpack.c.l.b16 %v268
    %v350 = vunpack.c.h.b16 %v268
    %v351 = vunpack.c.l.b16 %v269
    %v352 = vunpack.c.h.b16 %v269
    %v353 = vunpack.c.l.b16 %v270
    %v354 = vunpack.c.h.b16 %v270
    %v355 = vunpack.c.l.b16 %v271
    %v356 = vunpack.c.h.b16 %v271
    %v357 = vunpack.c.l.b16 %v272
    %v358 = vunpack.c.h.b16 %v272
    %v359 = vunpack.c.l.b16 %v273
    %v360 = vunpack.c.h.b16 %v273
    %v361 = vunpack.c.l.b16 %v274
    %v362 = vunpack.c.h.b16 %v274
    %v363 = vunpack.c.l.b16 %v275
    %v364 = vunpack.c.h.b16 %v275
    %v365 = vunpack.c.l.b16 %v276
    %v366 = vunpack.c.h.b16 %v276
    %v367 = vunpack.c.l.b16 %v277
    %v368 = vunpack.c.h.b16 %v277
    %v369 = vunpack.c.l.b16 %v278
    %v370 = vunpack.c.h.b16 %v278
    %v371 = vunpack.c.l.b16 %v279
    %v372 = vunpack.c.h.b16 %v279
    %v373 = vunpack.c.l.b16 %v280
    %v374 = vunpack.c.h.b16 %v280
    %v375 = vunpack.c.l.b16 %v281
    %v376 = vunpack.c.h.b16 %v281
    %v377 = vunpack.c.l.b16 %v282
    %v378 = vunpack.c.h.b16 %v282
    %v379 = vunpack.c.l.b16 %v283
    %v380 = vunpack.c.h.b16 %v283
    %v381 = vunpack.c.l.b16 %v284
    %v382 = vunpack.c.h.b16 %v284
    %v383 = vunpack.c.l.b16 %v285
    %v384 = vunpack.c.h.b16 %v285
    %v385 = vunpack.c.l.b16 %v286
    %v386 = vunpack.c.h.b16 %v286
    %v387 = vunpack.c.l.b16 %v287
    %v388 = vunpack.c.h.b16 %v287
    %v389 = vunpack.c.l.b16 %v288
    %v390 = vunpack.c.h.b16 %v288
    %v391 = vpack.c.b16 %v329, %v327
    %v392 = vpack.c.b16 %v330, %v328
    %v393 = vpack.c.b16 %v333, %v331
    %v394 = vpack.c.b16 %v334, %v332
    %v395 = vpack.c.b16 %v337, %v335
    %v396 = vpack.c.b16 %v338, %v336
    %v397 = vpack.c.b16 %v341, %v339
    %v398 = vpack.c.b16 %v342, %v340
    %v399 = vpack.c.b16 %v345, %v343
    %v400 = vpack.c.b16 %v346, %v344
    %v401 = vpack.c.b16 %v349, %v347
    %v402 = vpack.c.b16 %v350, %v348
    %v403 = vpack.c.b16 %v353, %v351
    %v404 = vpack.c.b16 %v354, %v352
    %v405 = vpack.c.b16 %v357, %v355
    %v406 = vpack.c.b16 %v358, %v356
    %v407 = vpack.c.b16 %v361, %v359
    %v408 = vpack.c.b16 %v362, %v360
    %v409 = vpack.c.b16 %v365, %v363
    %v410 = vpack.c.b16 %v366, %v364
    %v411 = vpack.c.b16 %v369, %v367
    %v412 = vpack.c.b16 %v370, %v368
    %v413 = vpack.c.b16 %v373, %v371
    %v414 = vpack.c.b16 %v374, %v372
    %v415 = vpack.c.b16 %v377, %v375
    %v416 = vpack.c.b16 %v378, %v376
    %v417 = vpack.c.b16 %v381, %v379
    %v418 = vpack.c.b16 %v382, %v380
    %v419 = vpack.c.b16 %v385, %v383
    %v420 = vpack.c.b16 %v386, %v384
    %v421 = vpack.c.b16 %v389, %v387
    %v422 = vpack.c.b16 %v390, %v388
    %455 = vmatpush.bf16.msra.mxu0 %v405
    %456 = vmatpush.bf16.msra.mxu0 %v403
    %457 = vmatpush.bf16.msra.mxu0 %v401
    %458 = vmatpush.bf16.msra.mxu0 %v399
    %459 = vmatpush.bf16.msra.mxu0 %v397
    %460 = vmatpush.bf16.msra.mxu0 %v395
    %461 = vmatpush.bf16.msra.mxu0 %v393
    %462 = vmatpush.bf16.msra.mxu0 %v391
    %463 = vmatmul.bf16.gmra.mxu0 %v255
    %v464 = vpop.f32.mrf.mxu0
    %v465 = vadd.f32 %v291, %v464
    %v466 = vpop.f32.mrf.mxu0
    %v467 = vadd.f32 %v291, %v466
    %468 = vdwg.mxu0
    %469 = vmatpush.bf16.msra.mxu0 %v421
    %470 = vmatpush.bf16.msra.mxu0 %v419
    %471 = vmatpush.bf16.msra.mxu0 %v417
    %472 = vmatpush.bf16.msra.mxu0 %v415
    %473 = vmatpush.bf16.msra.mxu0 %v413
    %474 = vmatpush.bf16.msra.mxu0 %v411
    %475 = vmatpush.bf16.msra.mxu0 %v409
    %476 = vmatpush.bf16.msra.mxu0 %v407
    %477 = vmatmul.bf16.gmra.mxu0 %v256
    %v478 = vpop.f32.mrf.mxu0
    %v479 = vadd.f32 %v465, %v478
    %v480 = vpop.f32.mrf.mxu0
    %v481 = vadd.f32 %v467, %v480
    %482 = vdwg.mxu0
    %483 = vmatpush.bf16.msra.mxu0 %v406
    %484 = vmatpush.bf16.msra.mxu0 %v404
    %485 = vmatpush.bf16.msra.mxu0 %v402
    %486 = vmatpush.bf16.msra.mxu0 %v400
    %487 = vmatpush.bf16.msra.mxu0 %v398
    %488 = vmatpush.bf16.msra.mxu0 %v396
    %489 = vmatpush.bf16.msra.mxu0 %v394
    %490 = vmatpush.bf16.msra.mxu0 %v392
    %491 = vmatmul.bf16.gmra.mxu0 %v255
    %v492 = vpop.f32.mrf.mxu0
    %v493 = vadd.f32 %v292, %v492
    %v494 = vpop.f32.mrf.mxu0
    %v495 = vadd.f32 %v292, %v494
    %496 = vdwg.mxu0
    %497 = vmatpush.bf16.msra.mxu0 %v422
    %498 = vmatpush.bf16.msra.mxu0 %v420
    %499 = vmatpush.bf16.msra.mxu0 %v418
    %500 = vmatpush.bf16.msra.mxu0 %v416
    %501 = vmatpush.bf16.msra.mxu0 %v414
    %502 = vmatpush.bf16.msra.mxu0 %v412
    %503 = vmatpush.bf16.msra.mxu0 %v410
    %504 = vmatpush.bf16.msra.mxu0 %v408
    %505 = vmatmul.bf16.gmra.mxu0 %v256
    %v506 = vpop.f32.mrf.mxu0
    %v507 = vadd.f32 %v493, %v506
    %v508 = vpop.f32.mrf.mxu0
    %v509 = vadd.f32 %v495, %v508
    %510 = vdwg.mxu0
    %v511 = vxor.u32 %v479, 2147483648
    %v512 = vxor.u32 %v507, 2147483648
    %v513 = vxor.u32 %v481, 2147483648
    %v514 = vxor.u32 %v509, 2147483648
    %v515 = vmul.f32 %v511, 1.442695
    %v516 = vpow.pop %v515
    %v517 = vmul.f32 %v512, 1.442695
    %v518 = vpow.pop %v517
    %v519 = vmul.f32 %v513, 1.442695
    %v520 = vpow.pop %v519
    %v521 = vmul.f32 %v514, 1.442695
    %v522 = vpow.pop %v521
    %v523 = vadd.f32 %v516, 1.0
    %v524 = vadd.f32 %v518, 1.0
    %v525 = vadd.f32 %v520, 1.0
    %v526 = vadd.f32 %v522, 1.0
    %v527 = vrcp.pop %v523
    %v528 = vmul.f32 %v523, %v527
    %v529 = vsub.f32 1.0, %v528
    %v530 = vmul.f32 %v527, %v529
    %v531 = vadd.f32 %v527, %v530
    %vm532 = vweird.f32 %v523
    %vm533 = vweird.f32 %v527
    %vm534 = vmor %vm532, %vm533
    %v535 = vsel %vm534, %v527, %v531
    %v536 = vand.u32 2147483647, %v523
    %vm537 = vcmp.eq.f32.partialorder %v536, 8.507059e+37
    %v538 = vand.u32 %v523, 2147483648
    %v539 = vor.u32 1.1754944e-38, %v538
    %v540 = vsel %vm537, %v539, %v535
    %v541 = vmul.f32 1.0, %v540
    %v542 = vrcp.pop %v524
    %v543 = vmul.f32 %v524, %v542
    %v544 = vsub.f32 1.0, %v543
    %v545 = vmul.f32 %v542, %v544
    %v546 = vadd.f32 %v542, %v545
    %vm547 = vweird.f32 %v524
    %vm548 = vweird.f32 %v542
    %vm549 = vmor %vm547, %vm548
    %v550 = vsel %vm549, %v542, %v546
    %v551 = vand.u32 2147483647, %v524
    %vm552 = vcmp.eq.f32.partialorder %v551, 8.507059e+37
    %v553 = vand.u32 %v524, 2147483648
    %v554 = vor.u32 1.1754944e-38, %v553
    %v555 = vsel %vm552, %v554, %v550
    %v556 = vmul.f32 1.0, %v555
    %v557 = vrcp.pop %v525
    %v558 = vmul.f32 %v525, %v557
    %v559 = vsub.f32 1.0, %v558
    %v560 = vmul.f32 %v557, %v559
    %v561 = vadd.f32 %v557, %v560
    %vm562 = vweird.f32 %v525
    %vm563 = vweird.f32 %v557
    %vm564 = vmor %vm562, %vm563
    %v565 = vsel %vm564, %v557, %v561
    %v566 = vand.u32 2147483647, %v525
    %vm567 = vcmp.eq.f32.partialorder %v566, 8.507059e+37
    %v568 = vand.u32 %v525, 2147483648
    %v569 = vor.u32 1.1754944e-38, %v568
    %v570 = vsel %vm567, %v569, %v565
    %v571 = vmul.f32 1.0, %v570
    %v572 = vrcp.pop %v526
    %v573 = vmul.f32 %v526, %v572
    %v574 = vsub.f32 1.0, %v573
    %v575 = vmul.f32 %v572, %v574
    %v576 = vadd.f32 %v572, %v575
    %vm577 = vweird.f32 %v526
    %vm578 = vweird.f32 %v572
    %vm579 = vmor %vm577, %vm578
    %v580 = vsel %vm579, %v572, %v576
    %v581 = vand.u32 2147483647, %v526
    %vm582 = vcmp.eq.f32.partialorder %v581, 8.507059e+37
    %v583 = vand.u32 %v526, 2147483648
    %v584 = vor.u32 1.1754944e-38, %v583
    %v585 = vsel %vm582, %v584, %v580
    %v586 = vmul.f32 1.0, %v585
    %587 = vst [vmem:[#allocation8] sm:$0xff] %v541
    %588 = vst [vmem:[#allocation8 + $0x8] sm:$0xff] %v556
    %589 = vst [vmem:[#allocation8 + $0x10] sm:$0xff] %v571
    %590 = vst [vmem:[#allocation8 + $0x18] sm:$0xff] %v586
    // Predicated region
    $region30: #{tpu_custom_call.1} parent=1 // pred_check
      _
    $region31: #{tpu_custom_call.1} parent=1 // pred_check_branch
      %592 = sbr.rel (0) target = $region33
    $region32: #{tpu_custom_call.1} parent=1 // pred_region
      %594 = vsyncadd [#allocation4], 0
      %s595 = sshll.u32 [#allocation8], 4
      %s596 = int_to_ptr.vmem [resolvable:$true] %s595
      %s597 = sshll.u32 %s4, 4
      %s598 = int_to_ptr.hbm [resolvable:$true] %s597
      %603 = dma.vmem_to_hbm [thread:$0]  %s596, 512, %s598, [#allocation4], 256, 256, 16
    $region33: #{tpu_custom_call.1} parent=1 // pred_fallthru
      _
    // Predicated region
    $region34: #{tpu_custom_call.1} parent=1 // pred_check
      _
    $region35: #{tpu_custom_call.1} parent=1 // pred_check_branch
      %605 = sbr.rel (0) target = $region37
    $region36: #{tpu_custom_call.1} parent=1 // pred_region
      %607 = dma.done [#allocation4], 512
    $region37: #{tpu_custom_call.1} parent=1 // pred_fallthru
      _
    %608 = vsyncpa [#allocation3], 1
    %609 = vsyncpa [#allocation6], 1
    %610 = vsyncpa [#allocation4], 1

</llo_original>
